<compile_context>
chip_gen: v7x
topology: tpu7x:2x2x1
jax: 0.10.0
libtpu: 0.0.40
codegen_flags: <defaults>
</compile_context>

<pallas_src>
import functools

import jax
import jax.numpy as jnp
from jax.experimental import pallas as pl
from jax.experimental.pallas import tpu as pltpu

_LANE = 128


def _realnvp_kernel(
    inT_ref,                                   # [dim+obser_dim, TB]  (x^T rows, then obser^T rows)
    w1_ref, b1_ref, w2_ref, b2_ref, w3_ref, b3_ref,
    outT_ref,                                  # [dim+1, TB]  (x_out^T rows, then log_det row)
    *, act_dtype,
):
    """All activations are [feature, TB]: batch on the lane axis."""
    dim = outT_ref.shape[0] - 1

    inp = inT_ref[...].astype(jnp.float32)     # [dim+obser_dim, TB]
    xT = inp[:dim, :]                          # [dim, TB]
    obs = inp[dim:, :]                         # [obser_dim, TB]

    # Fused t1/s1 network (block-diagonal weights packed once in the wrapper).
    h = jnp.dot(w1_ref[...], obs, preferred_element_type=jnp.float32) + b1_ref[...]
    h = jnp.tanh(h.astype(act_dtype)).astype(jnp.float32)      # [2H, TB]
    h = jnp.dot(w2_ref[...], h, preferred_element_type=jnp.float32) + b2_ref[...]
    h = jnp.tanh(h.astype(act_dtype)).astype(jnp.float32)      # [2H, TB]
    ts = jnp.dot(w3_ref[...], h, preferred_element_type=jnp.float32) + b3_ref[...]
    # ts: [2*dim, TB]; rows [0:dim] = t1^T, rows [dim:2*dim] = s1^T.

    t1 = ts[:dim, :]
    s1 = ts[dim:, :]

    x_outT = t1 + xT * jnp.exp(s1)                              # [dim, TB]
    log_detT = jnp.sum(s1, axis=0, keepdims=True)               # [1, TB] (sublane/XLU reduce)
    outT_ref[...] = jnp.concatenate([x_outT, log_detT], axis=0)  # single full-width store


def pack_params(params):
    """Pack the two independent 3-layer MLPs into one block-diagonal network.

    params: PyTorch-layout (weights [out,in], biases [out]) tuple
      (tw1, tb1, tw2, tb2, tw3, tb3, sw1, sb1, sw2, sb2, sw3, sb3)
    """
    (tw1, tb1, tw2, tb2, tw3, tb3, sw1, sb1, sw2, sb2, sw3, sb3) = params
    f32 = jnp.float32
    H = tw1.shape[0]
    dim = tw3.shape[0]

    w1 = jnp.concatenate([tw1, sw1], axis=0).astype(f32)                 # [2H, obser_dim]
    b1 = jnp.concatenate([tb1, sb1], axis=0).astype(f32)[:, None]        # [2H, 1]
    zH = jnp.zeros((H, H), f32)
    w2 = jnp.block([[tw2.astype(f32), zH], [zH, sw2.astype(f32)]])       # [2H, 2H]
    b2 = jnp.concatenate([tb2, sb2], axis=0).astype(f32)[:, None]        # [2H, 1]
    zD = jnp.zeros((dim, H), f32)
    w3 = jnp.block([[tw3.astype(f32), zD], [zD, sw3.astype(f32)]])       # [2*dim, 2H]
    b3 = jnp.concatenate([tb3, sb3], axis=0).astype(f32)[:, None]        # [2*dim, 1]
    return (w1, b1, w2, b2, w3, b3), dim, H


def realnvp_cond_0_forward_packed(inT, packed_weights, dim, *,
                                  tb_cap=16384, act_dtype=jnp.float32):
    """Feature-major entry point (no layout copies).

    inT: [dim+obser_dim, B] f32 — rows [0:dim] = x^T, rows [dim:] = obser^T.
    Returns [dim+1, B]: rows [0:dim] = x_out^T, row dim = log_det.
    """
    w1, b1, w2, b2, w3, b3 = packed_weights
    nrows, B = inT.shape
    obser_dim = nrows - dim
    H2 = w1.shape[0]  # 2H

    # Pad batch only to a lane multiple; ragged last TB tile handled by Pallas.
    B_pad = pl.cdiv(B, _LANE) * _LANE
    if B_pad != B:
        inT = jnp.pad(inT, ((0, 0), (0, B_pad - B)))
    TB = min(pl.cdiv(tb_cap, _LANE) * _LANE, B_pad)
    grid = (pl.cdiv(B_pad, TB),)

    # Cost hint for XLA's scheduler.
    flops = 2 * B_pad * (H2 * obser_dim + H2 * H2 + 2 * dim * H2)
    transcendentals = B_pad * (2 * H2 + dim)          # two tanh layers + exp
    bytes_accessed = 4 * (
        B_pad * (nrows + dim + 1)
        + w1.size + b1.size + w2.size + b2.size + w3.size + b3.size
    )

    def batch_spec(rows):
        return pl.BlockSpec((rows, TB), lambda i: (0, i))

    def resident(arr):
        # Constant index_map -> weight stays resident in VMEM across grid steps.
        return pl.BlockSpec(arr.shape, lambda i: (0, 0))

    outT = pl.pallas_call(
        functools.partial(_realnvp_kernel, act_dtype=act_dtype),
        grid=grid,
        out_shape=jax.ShapeDtypeStruct((dim + 1, B_pad), jnp.float32),
        in_specs=[
            batch_spec(nrows),      # packed [x^T ; obser^T]
            resident(w1), resident(b1),
            resident(w2), resident(b2),
            resident(w3), resident(b3),
        ],
        out_specs=batch_spec(dim + 1),   # packed [x_out^T ; log_det]
        compiler_params=pltpu.CompilerParams(
            dimension_semantics=("parallel",),
        ),
        cost_estimate=pl.CostEstimate(
            flops=flops,
            transcendentals=transcendentals,
            bytes_accessed=bytes_accessed,
        ),
    )(inT, w1, b1, w2, b2, w3, b3)

    return outT[:, :B]


def realnvp_cond_0_forward(x, obser, params, *, tb_cap=16384, act_dtype=jnp.float32):
    """Batch-major convenience wrapper matching the PyTorch interface.

    x: [B, dim], obser: [B, obser_dim].  Returns (x_out [B, dim], log_det [B]).
    All layout plumbing is one fused pack pass in and one unpack pass out;
    callers that keep feature-major data should use the *_packed entry point.
    """
    B, dim = x.shape
    packed_w, dim_p, _H = pack_params(params)
    assert dim_p == dim

    inT = jnp.concatenate(
        [x.astype(jnp.float32), obser.astype(jnp.float32)], axis=-1
    ).T                                                     # [dim+obser_dim, B]
    outT = realnvp_cond_0_forward_packed(
        inT, packed_w, dim, tb_cap=tb_cap, act_dtype=act_dtype)
    x_out = outT[:dim, :].T
    log_det = outT[dim, :]
    return x_out, log_det


# ----------------------------------------------------------------------------
# Reference + test harness
# ----------------------------------------------------------------------------
def make_fcnn_params(key, in_dim, out_dim, hidden_dim, std=0.1):
    """Mirrors zero_initialization: normal(std) weights, zero biases.
    PyTorch layout: weights [out, in], biases [out]."""
    k1, k2, k3 = jax.random.split(key, 3)
    w1 = jax.random.normal(k1, (hidden_dim, in_dim), jnp.float32) * std
    b1 = jnp.zeros((hidden_dim,), jnp.float32)
    w2 = jax.random.normal(k2, (hidden_dim, hidden_dim), jnp.float32) * std
    b2 = jnp.zeros((hidden_dim,), jnp.float32)
    w3 = jax.random.normal(k3, (out_dim, hidden_dim), jnp.float32) * std
    b3 = jnp.zeros((out_dim,), jnp.float32)
    return (w1, b1, w2, b2, w3, b3)


def reference_forward(x, obser, params):
    """Pure-JAX reference of the PyTorch forward."""
    (tw1, tb1, tw2, tb2, tw3, tb3, sw1, sb1, sw2, sb2, sw3, sb3) = params
    obs = obser.astype(jnp.float32)

    def mlp(w1, b1, w2, b2, w3, b3):
        h = jnp.tanh(obs @ w1.T + b1)
        h = jnp.tanh(h @ w2.T + b2)
        return h @ w3.T + b3

    t1 = mlp(tw1, tb1, tw2, tb2, tw3, tb3)
    s1 = mlp(sw1, sb1, sw2, sb2, sw3, sb3)
    x_out = t1 + x.astype(jnp.float32) * jnp.exp(s1)
    log_det = jnp.sum(s1, axis=-1)
    return x_out, log_det


if __name__ == "__main__":
    dim, obser_dim, hidden_dim = 4, 6, 8
    key = jax.random.PRNGKey(0)
    kt1, ks1, kd = jax.random.split(key, 3)

    # Only t1 / s1 are used in forward(); t2 / s2 exist in __init__ but are unused.
    t1_params = make_fcnn_params(kt1, obser_dim, dim, hidden_dim)
    s1_params = make_fcnn_params(ks1, obser_dim, dim, hidden_dim)
    params = (*t1_params, *s1_params)

    fwd = jax.jit(realnvp_cond_0_forward, static_argnames=("tb_cap", "act_dtype"))

    # --- Test 1: small batch (single grid step) ----------------------------
    B = 8
    kx, kobs, kd = jax.random.split(kd, 3)
    x = jax.random.normal(kx, (B, dim), jnp.float32)
    obser = jax.random.normal(kobs, (B, obser_dim), jnp.float32)

    x_out, log_det = fwd(x, obser, params)
    jax.block_until_ready((x_out, log_det))
    x_ref, ld_ref = reference_forward(x, obser, params)
    assert jnp.allclose(x_out, x_ref, atol=1e-5, rtol=1e-5)
    assert jnp.allclose(log_det, ld_ref, atol=1e-5, rtol=1e-5)

    # --- Test 2: multi-step grid with a ragged last batch tile -------------
    B2 = 300
    kx2, kobs2, kd = jax.random.split(kd, 3)
    x2 = jax.random.normal(kx2, (B2, dim), jnp.float32)
    obser2 = jax.random.normal(kobs2, (B2, obser_dim), jnp.float32)

    x_out2, log_det2 = fwd(x2, obser2, params, tb_cap=256)  # grid=(2,), ragged edge
    jax.block_until_ready((x_out2, log_det2))
    x_ref2, ld_ref2 = reference_forward(x2, obser2, params)
    assert jnp.allclose(x_out2, x_ref2, atol=1e-5, rtol=1e-5)
    assert jnp.allclose(log_det2, ld_ref2, atol=1e-5, rtol=1e-5)

    # Note: on v6e/v7x, pass act_dtype=jnp.bfloat16 for ~2x EUP tanh throughput
    # (requires relaxed tolerances; not recommended on v5e).

    print("KERNEL_OK")
</pallas_src>

<mosaic_0001>
module attributes {stable_mosaic.version = 11 : i64} {
  func.func @_realnvp_kernel(%arg0: i32, %arg1: memref<10x128xf32, #tpu.memory_space<vmem>>, %arg2: memref<16x6xf32, #tpu.memory_space<vmem>>, %arg3: memref<16x1xf32, #tpu.memory_space<vmem>>, %arg4: memref<16x16xf32, #tpu.memory_space<vmem>>, %arg5: memref<16x1xf32, #tpu.memory_space<vmem>>, %arg6: memref<8x16xf32, #tpu.memory_space<vmem>>, %arg7: memref<8x1xf32, #tpu.memory_space<vmem>>, %arg8: memref<5x128xf32, #tpu.memory_space<vmem>>) attributes {dimension_semantics = [#tpu.dimension_semantics<parallel>], iteration_bounds = array<i64: 1>, scalar_prefetch = 0 : i64, scratch_operands = 0 : i64, tpu.core_type = #tpu.core_type<tc>, window_params = [{transform_indices = @transform_0, window_bounds = array<i64: 10, 128>}, {pipeline_mode = #tpu.pipeline_mode<synchronous>, transform_indices = @transform_1, window_bounds = array<i64: 16, 6>}, {pipeline_mode = #tpu.pipeline_mode<synchronous>, transform_indices = @transform_2, window_bounds = array<i64: 16, 1>}, {pipeline_mode = #tpu.pipeline_mode<synchronous>, transform_indices = @transform_3, window_bounds = array<i64: 16, 16>}, {pipeline_mode = #tpu.pipeline_mode<synchronous>, transform_indices = @transform_4, window_bounds = array<i64: 16, 1>}, {pipeline_mode = #tpu.pipeline_mode<synchronous>, transform_indices = @transform_5, window_bounds = array<i64: 8, 16>}, {pipeline_mode = #tpu.pipeline_mode<synchronous>, transform_indices = @transform_6, window_bounds = array<i64: 8, 1>}, {transform_indices = @transform_7, window_bounds = array<i64: 5, 128>}]} {
    %c0 = arith.constant 0 : index
    %c0_0 = arith.constant 0 : index
    %0 = vector.load %arg1[%c0, %c0_0] : memref<10x128xf32, #tpu.memory_space<vmem>>, vector<10x128xf32>
    %1 = vector.extract_strided_slice %0 {offsets = [0, 0], sizes = [4, 128], strides = [1, 1]} : vector<10x128xf32> to vector<4x128xf32>
    %2 = vector.extract_strided_slice %0 {offsets = [4, 0], sizes = [6, 128], strides = [1, 1]} : vector<10x128xf32> to vector<6x128xf32>
    %c0_1 = arith.constant 0 : index
    %c0_2 = arith.constant 0 : index
    %3 = vector.load %arg2[%c0_1, %c0_2] : memref<16x6xf32, #tpu.memory_space<vmem>>, vector<16x6xf32>
    %cst = arith.constant dense<0.000000e+00> : vector<16x128xf32>
    %4 = tpu.matmul %3, %2, %cst {dimension_numbers = #tpu.dot_dimension_numbers<[1], [0], [0], [1], [0, 0, 1, 1], [], []>} : vector<16x6xf32>, vector<6x128xf32>, vector<16x128xf32> -> vector<16x128xf32>
    %c0_3 = arith.constant 0 : index
    %c0_4 = arith.constant 0 : index
    %5 = vector.load %arg3[%c0_3, %c0_4] : memref<16x1xf32, #tpu.memory_space<vmem>>, vector<16x1xf32>
    %6 = vector.broadcast %5 : vector<16x1xf32> to vector<16x128xf32>
    %7 = arith.addf %4, %6 : vector<16x128xf32>
    %8 = math.tanh %7 : vector<16x128xf32>
    %c0_5 = arith.constant 0 : index
    %c0_6 = arith.constant 0 : index
    %9 = vector.load %arg4[%c0_5, %c0_6] : memref<16x16xf32, #tpu.memory_space<vmem>>, vector<16x16xf32>
    %cst_7 = arith.constant dense<0.000000e+00> : vector<16x128xf32>
    %10 = tpu.matmul %9, %8, %cst_7 {dimension_numbers = #tpu.dot_dimension_numbers<[1], [0], [0], [1], [0, 0, 1, 1], [], []>} : vector<16x16xf32>, vector<16x128xf32>, vector<16x128xf32> -> vector<16x128xf32>
    %c0_8 = arith.constant 0 : index
    %c0_9 = arith.constant 0 : index
    %11 = vector.load %arg5[%c0_8, %c0_9] : memref<16x1xf32, #tpu.memory_space<vmem>>, vector<16x1xf32>
    %12 = vector.broadcast %11 : vector<16x1xf32> to vector<16x128xf32>
    %13 = arith.addf %10, %12 : vector<16x128xf32>
    %14 = math.tanh %13 : vector<16x128xf32>
    %c0_10 = arith.constant 0 : index
    %c0_11 = arith.constant 0 : index
    %15 = vector.load %arg6[%c0_10, %c0_11] : memref<8x16xf32, #tpu.memory_space<vmem>>, vector<8x16xf32>
    %cst_12 = arith.constant dense<0.000000e+00> : vector<8x128xf32>
    %16 = tpu.matmul %15, %14, %cst_12 {dimension_numbers = #tpu.dot_dimension_numbers<[1], [0], [0], [1], [0, 0, 1, 1], [], []>} : vector<8x16xf32>, vector<16x128xf32>, vector<8x128xf32> -> vector<8x128xf32>
    %c0_13 = arith.constant 0 : index
    %c0_14 = arith.constant 0 : index
    %17 = vector.load %arg7[%c0_13, %c0_14] : memref<8x1xf32, #tpu.memory_space<vmem>>, vector<8x1xf32>
    %18 = vector.broadcast %17 : vector<8x1xf32> to vector<8x128xf32>
    %19 = arith.addf %16, %18 : vector<8x128xf32>
    %20 = vector.extract_strided_slice %19 {offsets = [0, 0], sizes = [4, 128], strides = [1, 1]} : vector<8x128xf32> to vector<4x128xf32>
    %21 = vector.extract_strided_slice %19 {offsets = [4, 0], sizes = [4, 128], strides = [1, 1]} : vector<8x128xf32> to vector<4x128xf32>
    %22 = math.exp %21 : vector<4x128xf32>
    %23 = arith.mulf %1, %22 : vector<4x128xf32>
    %24 = arith.addf %20, %23 : vector<4x128xf32>
    %cst_15 = arith.constant dense<0.000000e+00> : vector<128xf32>
    %25 = vector.multi_reduction <add>, %21, %cst_15 [0] : vector<4x128xf32> to vector<128xf32>
    %26 = vector.shape_cast %25 : vector<128xf32> to vector<1x128xf32>
    %27 = tpu.concatenate %24, %26 in 0 : vector<4x128xf32>, vector<1x128xf32> -> vector<5x128xf32>
    %c0_16 = arith.constant 0 : index
    %c0_17 = arith.constant 0 : index
    %28 = vector.load %arg8[%c0_16, %c0_17] : memref<5x128xf32, #tpu.memory_space<vmem>>, vector<5x128xf32>
    tpu.vector_store %arg8[%c0_16, %c0_17], %27 {strides = array<i32>} : memref<5x128xf32, #tpu.memory_space<vmem>>, vector<5x128xf32>,
    return
  }
  func.func @transform_0(%arg0: i32) -> (i32, i32) {
    %c0_i32 = arith.constant 0 : i32
    %c0_i32_0 = arith.constant 0 : i32
    return %c0_i32, %arg0 : i32, i32
  }
  func.func @transform_1(%arg0: i32) -> (i32, i32) {
    %c0_i32 = arith.constant 0 : i32
    %c0_i32_0 = arith.constant 0 : i32
    %c0_i32_1 = arith.constant 0 : i32
    return %c0_i32, %c0_i32_0 : i32, i32
  }
  func.func @transform_2(%arg0: i32) -> (i32, i32) {
    %c0_i32 = arith.constant 0 : i32
    %c0_i32_0 = arith.constant 0 : i32
    %c0_i32_1 = arith.constant 0 : i32
    return %c0_i32, %c0_i32_0 : i32, i32
  }
  func.func @transform_3(%arg0: i32) -> (i32, i32) {
    %c0_i32 = arith.constant 0 : i32
    %c0_i32_0 = arith.constant 0 : i32
    %c0_i32_1 = arith.constant 0 : i32
    return %c0_i32, %c0_i32_0 : i32, i32
  }
  func.func @transform_4(%arg0: i32) -> (i32, i32) {
    %c0_i32 = arith.constant 0 : i32
    %c0_i32_0 = arith.constant 0 : i32
    %c0_i32_1 = arith.constant 0 : i32
    return %c0_i32, %c0_i32_0 : i32, i32
  }
  func.func @transform_5(%arg0: i32) -> (i32, i32) {
    %c0_i32 = arith.constant 0 : i32
    %c0_i32_0 = arith.constant 0 : i32
    %c0_i32_1 = arith.constant 0 : i32
    return %c0_i32, %c0_i32_0 : i32, i32
  }
  func.func @transform_6(%arg0: i32) -> (i32, i32) {
    %c0_i32 = arith.constant 0 : i32
    %c0_i32_0 = arith.constant 0 : i32
    %c0_i32_1 = arith.constant 0 : i32
    return %c0_i32, %c0_i32_0 : i32, i32
  }
  func.func @transform_7(%arg0: i32) -> (i32, i32) {
    %c0_i32 = arith.constant 0 : i32
    %c0_i32_0 = arith.constant 0 : i32
    return %c0_i32, %arg0 : i32, i32
  }
}

</mosaic_0001>

<llo_original>
// kernel: realnvp_cond_0_forward.1
$region0: #{realnvp_cond_0_forward.1}
  #allocation0 [shape = 'u32[]', space=smem, size = 0x4, offset = 0x4, fixed_abs, tag = 'smem constant byte address 0x4 - core index']
  #allocation1 [shape = 'u32[144,128]{1,0:T(1,128)}', space=vmem, size = 0x12000, scoped, tag = 'internal scratch']
  %s0 = inlined_call_operand.vmem [shape: f32[10,128], index: 0, kind: input, shape index: {}]
  %s1 = inlined_call_operand.vmem [shape: f32[16,6], index: 1, kind: input, shape index: {}]
  %s2 = inlined_call_operand.vmem [shape: f32[16,1], index: 2, kind: input, shape index: {}]
  %s3 = inlined_call_operand.vmem [shape: f32[16,16], index: 3, kind: input, shape index: {}]
  %s4 = inlined_call_operand.vmem [shape: f32[16,1], index: 4, kind: input, shape index: {}]
  %s5 = inlined_call_operand.vmem [shape: f32[8,16], index: 5, kind: input, shape index: {}]
  %s6 = inlined_call_operand.vmem [shape: f32[8,1], index: 6, kind: input, shape index: {}]
  %s7 = inlined_call_operand.vmem [shape: f32[5,128], index: 7, kind: output, shape index: {}]
  %s8 = sld [smem:[#allocation0]]
  $region38: #{realnvp_cond_0_forward.1} parent=0
    _
  %s10 = ssub.s32 1, %s8
  %s11 = scalar_select 0, %s10, %s8
  // Predicated region
  $region2: #{realnvp_cond_0_forward.1} parent=0 // pred_check
    _
  $region3: #{realnvp_cond_0_forward.1} parent=0 // pred_check_branch
    %13 = sbr.rel (0) target = $region5
  $region4: #{realnvp_cond_0_forward.1} parent=0 // pred_region
    _
  $region5: #{realnvp_cond_0_forward.1} parent=0 // pred_fallthru
    _
  // Predicated region
  $region6: #{realnvp_cond_0_forward.1} parent=0 // pred_check
    _
  $region7: #{realnvp_cond_0_forward.1} parent=0 // pred_check_branch
    %15 = sbr.rel (0) target = $region9
  $region8: #{realnvp_cond_0_forward.1} parent=0 // pred_region
    _
  $region9: #{realnvp_cond_0_forward.1} parent=0 // pred_fallthru
    _
  // Predicated region
  $region10: #{realnvp_cond_0_forward.1} parent=0 // pred_check
    _
  $region11: #{realnvp_cond_0_forward.1} parent=0 // pred_check_branch
    %17 = sbr.rel (0) target = $region13
  $region12: #{realnvp_cond_0_forward.1} parent=0 // pred_region
    _
  $region13: #{realnvp_cond_0_forward.1} parent=0 // pred_fallthru
    _
  // Predicated region
  $region14: #{realnvp_cond_0_forward.1} parent=0 // pred_check
    _
  $region15: #{realnvp_cond_0_forward.1} parent=0 // pred_check_branch
    %19 = sbr.rel (0) target = $region17
  $region16: #{realnvp_cond_0_forward.1} parent=0 // pred_region
    _
  $region17: #{realnvp_cond_0_forward.1} parent=0 // pred_fallthru
    _
  // Predicated region
  $region18: #{realnvp_cond_0_forward.1} parent=0 // pred_check
    _
  $region19: #{realnvp_cond_0_forward.1} parent=0 // pred_check_branch
    %21 = sbr.rel (0) target = $region21
  $region20: #{realnvp_cond_0_forward.1} parent=0 // pred_region
    _
  $region21: #{realnvp_cond_0_forward.1} parent=0 // pred_fallthru
    _
  // Predicated region
  $region22: #{realnvp_cond_0_forward.1} parent=0 // pred_check
    _
  $region23: #{realnvp_cond_0_forward.1} parent=0 // pred_check_branch
    %23 = sbr.rel (0) target = $region25
  $region24: #{realnvp_cond_0_forward.1} parent=0 // pred_region
    _
  $region25: #{realnvp_cond_0_forward.1} parent=0 // pred_fallthru
    _
  // Predicated region
  $region26: #{realnvp_cond_0_forward.1} parent=0 // pred_check
    _
  $region27: #{realnvp_cond_0_forward.1} parent=0 // pred_check_branch
    %25 = sbr.rel (0) target = $region29
  $region28: #{realnvp_cond_0_forward.1} parent=0 // pred_region
    _
  $region29: #{realnvp_cond_0_forward.1} parent=0 // pred_fallthru
    _
  %v26 = vld [vmem:[%s0] sm:$0xff]
  %v27 = vld [vmem:[%s0 + $0x8] sm:$0x3]
  %v28 = vld [vmem:[%s1] sm:$0xff]
  %v29 = vld [vmem:[%s1 + $0x8] sm:$0xff]
  %v30 = vld [vmem:[%s2] sm:$0xff]
  %v31 = vld [vmem:[%s2 + $0x8] sm:$0xff]
  %33 = vset.pattern.permute.xlu0 0
  %34 = vperm.xlu0 %33, %v30
  %v35 = vpop.permute.xlu0 %34
  %38 = vset.pattern.permute.xlu0 0
  %39 = vperm.xlu0 %38, %v31
  %v40 = vpop.permute.xlu0 %39
  %vm44 = vcmask 1043456
  %v45 = vrot.slane %v26, 4
  %v46 = vrot.slane %v27, 4
  %v47 = vsel %vm44, %v45, %v46
  %vm48 = vcmask 48128
  %v50 = vsel %vm48, %v28, 0
  %v53 = vsel %vm48, %v29, 0
  %vm55 = vcmask 1045504
  %v56 = vsel %vm55, %v47, 0
  %58 = vmatprep.subr.mxu0 0.0
  %59 = vmatpush1.msra.mxu0 %v56
  %60 = vmatprep.subr.mxu0 0.0
  %61 = vmatpush1.msra.mxu0 0.0
  %62 = vmatprep.subr.mxu0 0.0
  %63 = vmatpush1.msra.mxu0 0.0
  %64 = vmatprep.subr.mxu0 0.0
  %65 = vmatpush1.msra.mxu0 0.0
  %66 = vmatprep.subr.mxu0 0.0
  %67 = vmatpush1.msra.mxu0 0.0
  %68 = vmatprep.subr.mxu0 0.0
  %69 = vmatpush1.msra.mxu0 0.0
  %70 = vmatprep.subr.mxu0 0.0
  %71 = vmatpush1.msra.mxu0 0.0
  %72 = vmatprep.subr.mxu0 0.0
  %73 = vmatpush1.msra.mxu0 0.0
  %74 = vmatprep.subr.mxu0 0.0
  %75 = vmatpush1.msra.mxu0 0.0
  %76 = vmatprep.subr.mxu0 0.0
  %77 = vmatpush1.msra.mxu0 0.0
  %78 = vmatprep.subr.mxu0 0.0
  %79 = vmatpush1.msra.mxu0 0.0
  %80 = vmatprep.subr.mxu0 0.0
  %81 = vmatpush1.msra.mxu0 0.0
  %82 = vmatprep.subr.mxu0 0.0
  %83 = vmatpush1.msra.mxu0 0.0
  %84 = vmatprep.subr.mxu0 0.0
  %85 = vmatpush1.msra.mxu0 0.0
  %86 = vmatprep.subr.mxu0 0.0
  %87 = vmatpush1.msra.mxu0 0.0
  %88 = vmatprep.subr.mxu0 0.0
  %89 = vmatpush1.msra.mxu0 0.0
  %90 = vmatprep.subr.mxu0 0.0
  %91 = vmatpush1.msra.mxu0 0.0
  %92 = vmatprep.subr.mxu0 0.0
  %93 = vmatpush1.msra.mxu0 0.0
  %94 = vmatprep.subr.mxu0 0.0
  %95 = vmatpush1.msra.mxu0 0.0
  %96 = vmatprep.subr.mxu0 0.0
  %97 = vmatpush1.msra.mxu0 0.0
  %98 = vmatprep.subr.mxu0 0.0
  %99 = vmatpush1.msra.mxu0 0.0
  %100 = vmatprep.subr.mxu0 0.0
  %101 = vmatpush1.msra.mxu0 0.0
  %102 = vmatprep.subr.mxu0 0.0
  %103 = vmatpush1.msra.mxu0 0.0
  %104 = vmatprep.subr.mxu0 0.0
  %105 = vmatpush1.msra.mxu0 0.0
  %106 = vmatprep.subr.mxu0 0.0
  %107 = vmatpush1.msra.mxu0 0.0
  %108 = vmatprep.subr.mxu0 0.0
  %109 = vmatpush1.msra.mxu0 0.0
  %110 = vmatprep.subr.mxu0 0.0
  %111 = vmatpush1.msra.mxu0 0.0
  %112 = vmatprep.subr.mxu0 0.0
  %113 = vmatpush1.msra.mxu0 0.0
  %114 = vmatprep.subr.mxu0 0.0
  %115 = vmatpush1.msra.mxu0 0.0
  %116 = vmatprep.subr.mxu0 0.0
  %117 = vmatpush1.msra.mxu0 0.0
  %118 = vmatprep.subr.mxu0 0.0
  %119 = vmatpush1.msra.mxu0 0.0
  %120 = vmatprep.subr.mxu0 0.0
  %121 = vmatpush1.msra.mxu0 0.0
  %122 = vmatprep.mubr.f32.mxu0 0.0
  %123 = vmatmul.mubr.f32.gmra.mrb[0].mxu0 %v50
  %v124 = vpop.f32.mrb[0].mxu0
  %v125 = vadd.f32 %v35, %v124
  %v126 = vpop.f32.mrb[0].mxu0
  %127 = vmatprep.mubr.f32.mxu0 0.0
  %128 = vmatmul.mubr.f32.gmra.mrb[0].mxu0 %v53
  %v129 = vpop.f32.mrb[0].mxu0
  %v130 = vadd.f32 %v40, %v129
  %v131 = vpop.f32.mrb[0].mxu0
  %132 = vdwg.mxu0
  %v133 = vtanh.pop %v125
  %v134 = vtanh.pop %v130
  %v135 = vld [vmem:[%s3] sm:$0xff]
  %v136 = vld [vmem:[%s3 + $0x8] sm:$0xff]
  %v137 = vld [vmem:[%s4] sm:$0xff]
  %v138 = vld [vmem:[%s4 + $0x8] sm:$0xff]
  %140 = vset.pattern.permute.xlu0 0
  %141 = vperm.xlu0 %140, %v137
  %v142 = vpop.permute.xlu0 %141
  %145 = vset.pattern.permute.xlu0 0
  %146 = vperm.xlu0 %145, %v138
  %v147 = vpop.permute.xlu0 %146
  %vm149 = vcmask 130048
  %v151 = vsel %vm149, %v135, 0
  %v154 = vsel %vm149, %v136, 0
  %156 = vmatprep.subr.mxu0 0.0
  %157 = vmatpush1.msra.mxu0 %v133
  %158 = vmatprep.subr.mxu0 0.0
  %159 = vmatpush1.msra.mxu0 %v134
  %160 = vmatprep.subr.mxu0 0.0
  %161 = vmatpush1.msra.mxu0 0.0
  %162 = vmatprep.subr.mxu0 0.0
  %163 = vmatpush1.msra.mxu0 0.0
  %164 = vmatprep.subr.mxu0 0.0
  %165 = vmatpush1.msra.mxu0 0.0
  %166 = vmatprep.subr.mxu0 0.0
  %167 = vmatpush1.msra.mxu0 0.0
  %168 = vmatprep.subr.mxu0 0.0
  %169 = vmatpush1.msra.mxu0 0.0
  %170 = vmatprep.subr.mxu0 0.0
  %171 = vmatpush1.msra.mxu0 0.0
  %172 = vmatprep.subr.mxu0 0.0
  %173 = vmatpush1.msra.mxu0 0.0
  %174 = vmatprep.subr.mxu0 0.0
  %175 = vmatpush1.msra.mxu0 0.0
  %176 = vmatprep.subr.mxu0 0.0
  %177 = vmatpush1.msra.mxu0 0.0
  %178 = vmatprep.subr.mxu0 0.0
  %179 = vmatpush1.msra.mxu0 0.0
  %180 = vmatprep.subr.mxu0 0.0
  %181 = vmatpush1.msra.mxu0 0.0
  %182 = vmatprep.subr.mxu0 0.0
  %183 = vmatpush1.msra.mxu0 0.0
  %184 = vmatprep.subr.mxu0 0.0
  %185 = vmatpush1.msra.mxu0 0.0
  %186 = vmatprep.subr.mxu0 0.0
  %187 = vmatpush1.msra.mxu0 0.0
  %188 = vmatprep.subr.mxu0 0.0
  %189 = vmatpush1.msra.mxu0 0.0
  %190 = vmatprep.subr.mxu0 0.0
  %191 = vmatpush1.msra.mxu0 0.0
  %192 = vmatprep.subr.mxu0 0.0
  %193 = vmatpush1.msra.mxu0 0.0
  %194 = vmatprep.subr.mxu0 0.0
  %195 = vmatpush1.msra.mxu0 0.0
  %196 = vmatprep.subr.mxu0 0.0
  %197 = vmatpush1.msra.mxu0 0.0
  %198 = vmatprep.subr.mxu0 0.0
  %199 = vmatpush1.msra.mxu0 0.0
  %200 = vmatprep.subr.mxu0 0.0
  %201 = vmatpush1.msra.mxu0 0.0
  %202 = vmatprep.subr.mxu0 0.0
  %203 = vmatpush1.msra.mxu0 0.0
  %204 = vmatprep.subr.mxu0 0.0
  %205 = vmatpush1.msra.mxu0 0.0
  %206 = vmatprep.subr.mxu0 0.0
  %207 = vmatpush1.msra.mxu0 0.0
  %208 = vmatprep.subr.mxu0 0.0
  %209 = vmatpush1.msra.mxu0 0.0
  %210 = vmatprep.subr.mxu0 0.0
  %211 = vmatpush1.msra.mxu0 0.0
  %212 = vmatprep.subr.mxu0 0.0
  %213 = vmatpush1.msra.mxu0 0.0
  %214 = vmatprep.subr.mxu0 0.0
  %215 = vmatpush1.msra.mxu0 0.0
  %216 = vmatprep.subr.mxu0 0.0
  %217 = vmatpush1.msra.mxu0 0.0
  %218 = vmatprep.subr.mxu0 0.0
  %219 = vmatpush1.msra.mxu0 0.0
  %220 = vmatprep.mubr.f32.mxu0 0.0
  %221 = vmatmul.mubr.f32.gmra.mrb[0].mxu0 %v151
  %v222 = vpop.f32.mrb[0].mxu0
  %v223 = vadd.f32 %v142, %v222
  %v224 = vpop.f32.mrb[0].mxu0
  %225 = vmatprep.mubr.f32.mxu0 0.0
  %226 = vmatmul.mubr.f32.gmra.mrb[0].mxu0 %v154
  %v227 = vpop.f32.mrb[0].mxu0
  %v228 = vadd.f32 %v147, %v227
  %v229 = vpop.f32.mrb[0].mxu0
  %230 = vdwg.mxu0
  %v231 = vtanh.pop %v223
  %v232 = vtanh.pop %v228
  %v233 = vld [vmem:[%s5] sm:$0xff]
  %v234 = vld [vmem:[%s6] sm:$0xff]
  %236 = vset.pattern.permute.xlu0 0
  %237 = vperm.xlu0 %236, %v234
  %v238 = vpop.permute.xlu0 %237
  %v241 = vsel %vm149, %v233, 0
  %243 = vmatprep.subr.mxu0 0.0
  %244 = vmatpush1.msra.mxu0 %v231
  %245 = vmatprep.subr.mxu0 0.0
  %246 = vmatpush1.msra.mxu0 %v232
  %247 = vmatprep.subr.mxu0 0.0
  %248 = vmatpush1.msra.mxu0 0.0
  %249 = vmatprep.subr.mxu0 0.0
  %250 = vmatpush1.msra.mxu0 0.0
  %251 = vmatprep.subr.mxu0 0.0
  %252 = vmatpush1.msra.mxu0 0.0
  %253 = vmatprep.subr.mxu0 0.0
  %254 = vmatpush1.msra.mxu0 0.0
  %255 = vmatprep.subr.mxu0 0.0
  %256 = vmatpush1.msra.mxu0 0.0
  %257 = vmatprep.subr.mxu0 0.0
  %258 = vmatpush1.msra.mxu0 0.0
  %259 = vmatprep.subr.mxu0 0.0
  %260 = vmatpush1.msra.mxu0 0.0
  %261 = vmatprep.subr.mxu0 0.0
  %262 = vmatpush1.msra.mxu0 0.0
  %263 = vmatprep.subr.mxu0 0.0
  %264 = vmatpush1.msra.mxu0 0.0
  %265 = vmatprep.subr.mxu0 0.0
  %266 = vmatpush1.msra.mxu0 0.0
  %267 = vmatprep.subr.mxu0 0.0
  %268 = vmatpush1.msra.mxu0 0.0
  %269 = vmatprep.subr.mxu0 0.0
  %270 = vmatpush1.msra.mxu0 0.0
  %271 = vmatprep.subr.mxu0 0.0
  %272 = vmatpush1.msra.mxu0 0.0
  %273 = vmatprep.subr.mxu0 0.0
  %274 = vmatpush1.msra.mxu0 0.0
  %275 = vmatprep.subr.mxu0 0.0
  %276 = vmatpush1.msra.mxu0 0.0
  %277 = vmatprep.subr.mxu0 0.0
  %278 = vmatpush1.msra.mxu0 0.0
  %279 = vmatprep.subr.mxu0 0.0
  %280 = vmatpush1.msra.mxu0 0.0
  %281 = vmatprep.subr.mxu0 0.0
  %282 = vmatpush1.msra.mxu0 0.0
  %283 = vmatprep.subr.mxu0 0.0
  %284 = vmatpush1.msra.mxu0 0.0
  %285 = vmatprep.subr.mxu0 0.0
  %286 = vmatpush1.msra.mxu0 0.0
  %287 = vmatprep.subr.mxu0 0.0
  %288 = vmatpush1.msra.mxu0 0.0
  %289 = vmatprep.subr.mxu0 0.0
  %290 = vmatpush1.msra.mxu0 0.0
  %291 = vmatprep.subr.mxu0 0.0
  %292 = vmatpush1.msra.mxu0 0.0
  %293 = vmatprep.subr.mxu0 0.0
  %294 = vmatpush1.msra.mxu0 0.0
  %295 = vmatprep.subr.mxu0 0.0
  %296 = vmatpush1.msra.mxu0 0.0
  %297 = vmatprep.subr.mxu0 0.0
  %298 = vmatpush1.msra.mxu0 0.0
  %299 = vmatprep.subr.mxu0 0.0
  %300 = vmatpush1.msra.mxu0 0.0
  %301 = vmatprep.subr.mxu0 0.0
  %302 = vmatpush1.msra.mxu0 0.0
  %303 = vmatprep.subr.mxu0 0.0
  %304 = vmatpush1.msra.mxu0 0.0
  %305 = vmatprep.subr.mxu0 0.0
  %306 = vmatpush1.msra.mxu0 0.0
  %307 = vmatprep.mubr.f32.mxu0 0.0
  %308 = vmatmul.mubr.f32.gmra.mrb[0].mxu0 %v241
  %v309 = vpop.f32.mrb[0].mxu0
  %v310 = vadd.f32 %v238, %v309
  %v311 = vpop.f32.mrb[0].mxu0
  %312 = vdwg.mxu0
  %v313 = vmul.f32 %v310, 1.442695
  %v314 = vpow.pop %v313
  %v316 = vrot.slane %v314, 4
  %v318 = vmul.f32 %v26, %v316
  %v319 = vadd.f32 %v310, %v318
  %v321 = vrot.slane %v310, 4
  %v323 = vsel %vm44, %v321, 0.0
  %v324 = vrot.slane %v323, 4
  %v325 = vadd.f32 %v323, %v324
  %v326 = vrot.slane %v325, 2
  %v327 = vadd.f32 %v325, %v326
  %v328 = vrot.slane %v327, 1
  %v329 = vadd.f32 %v327, %v328
  %v330 = vsel %vm44, %v319, %v329
  %331 = vst [vmem:[%s7] sm:$0x1f] %v330
  // Predicated region
  $region30: #{realnvp_cond_0_forward.1} parent=0 // pred_check
    _
  $region31: #{realnvp_cond_0_forward.1} parent=0 // pred_check_branch
    %333 = sbr.rel (0) target = $region33
  $region32: #{realnvp_cond_0_forward.1} parent=0 // pred_region
    _
  $region33: #{realnvp_cond_0_forward.1} parent=0 // pred_fallthru
    _
  // Predicated region
  $region34: #{realnvp_cond_0_forward.1} parent=0 // pred_check
    _
  $region35: #{realnvp_cond_0_forward.1} parent=0 // pred_check_branch
    %335 = sbr.rel (0) target = $region37
  $region36: #{realnvp_cond_0_forward.1} parent=0 // pred_region
    _
  $region37: #{realnvp_cond_0_forward.1} parent=0 // pred_fallthru
    _

</llo_original>
